<compile_context>
chip_gen: v6e
topology: v6e:2x2x1
jax: 0.10.0
libtpu: 0.0.40
codegen_flags: <defaults>
</compile_context>

<pallas_src>
import numpy as np
import jax
import jax.numpy as jnp
from jax import lax
from jax.experimental import pallas as pl
from jax.experimental.pallas import tpu as pltpu

EPS = 1e-5
VMEM_LIMIT = 48 * 1024 * 1024   # safe on v5e/v6e (128 MiB) and v7x (64 MiB/TC)


# ----------------------------------------------------------------------------
# helpers
# ----------------------------------------------------------------------------
def _pick_row_tile(n_rows, max_tile=1024):
    """Largest row tile <= max_tile that divides n_rows (multiple of 8 when
    the tile is not the whole axis)."""
    if n_rows <= max_tile:
        return n_rows
    start = max_tile - (max_tile % 8)
    for t in range(start, 7, -8):
        if n_rows % t == 0:
            return t
    # TODO(synk): ragged-tail masking for row counts with no nice divisor.
    for t in range(max_tile, 0, -1):
        if n_rows % t == 0:
            return t
    return n_rows


def _block_diag(mat, w):
    """(Ci, Co) -> (w*Ci, w*Co) block-diagonal weight (one block per W pos)."""
    ci, co = mat.shape
    eye = jnp.eye(w, dtype=mat.dtype)
    return (eye[:, None, :, None] * mat[None, :, None, :]).reshape(w * ci, w * co)


def _bn_fold(t_sum, t_ssq, count, gamma, beta):
    """Fold training-mode batch-norm (biased variance) into scale/shift."""
    mean = t_sum / count
    var = jnp.maximum(t_ssq / count - mean * mean, 0.0)
    scale = gamma / jnp.sqrt(var + EPS)
    shift = beta - mean * scale
    return scale, shift


def _tile_w(v, w):
    """Per-channel (C,) vector -> (1, W*C) in the fused w*C + c lane layout."""
    return jnp.tile(v, w).reshape(1, w * v.shape[0])


# ----------------------------------------------------------------------------
# kernels
# ----------------------------------------------------------------------------
def _conv1x1_stats_kernel(x_ref, w_ref, b_ref, o_ref, sum_ref, ssq_ref):
    """o = x @ Wblk + b ; accumulate per-(w,c) sum / sum-of-squares of o."""
    i = pl.program_id(1)
    o = jnp.dot(x_ref[...], w_ref[...], preferred_element_type=jnp.float32) + b_ref[...]
    o_ref[...] = o

    @pl.when(i == 0)
    def _():
        sum_ref[...] = jnp.zeros_like(sum_ref)
        ssq_ref[...] = jnp.zeros_like(ssq_ref)

    sum_ref[0] += jnp.sum(o, axis=0, keepdims=True)
    ssq_ref[0] += jnp.sum(o * o, axis=0, keepdims=True)


def _bn_relu_conv1x1_stats_kernel(s_ref, sc_ref, sh_ref, w_ref, b_ref,
                                  a_ref, o_ref, sum_ref, ssq_ref):
    """a = relu(s*scale + shift) ; o = a @ Wblk + b ; accumulate stats of o."""
    i = pl.program_id(1)
    a = jnp.maximum(s_ref[...] * sc_ref[...] + sh_ref[...], 0.0)
    a_ref[...] = a
    o = jnp.dot(a, w_ref[...], preferred_element_type=jnp.float32) + b_ref[...]
    o_ref[...] = o

    @pl.when(i == 0)
    def _():
        sum_ref[...] = jnp.zeros_like(sum_ref)
        ssq_ref[...] = jnp.zeros_like(ssq_ref)

    sum_ref[0] += jnp.sum(o, axis=0, keepdims=True)
    ssq_ref[0] += jnp.sum(o * o, axis=0, keepdims=True)


def _make_conv3_kernel(H, W, Csq, Cexp):
    """3x3x3 conv (pad=1) with fused im2col, one output D-plane per step."""
    WCsq = W * Csq
    WCexp = W * Cexp

    def kernel(pm_ref, p0_ref, pp_ref, w_ref, b_ref, o_ref, sum_ref, ssq_ref):
        d = pl.program_id(1)
        # three padded input planes (d-1, d, d+1), each (H+2, (W+2)*Csq)
        planes = (pm_ref[0, 0], p0_ref[0, 0], pp_ref[0, 0])

        acc = jnp.zeros((H, WCexp), jnp.float32) + b_ref[...]
        k = 0
        for kd in range(3):
            pk = planes[kd]
            for kh in range(3):
                for kw in range(3):
                    # shifted (H, W*Csq) view built from VMEM -- no HBM im2col
                    v = pk[kh:kh + H, kw * Csq:kw * Csq + WCsq]
                    acc = acc + jnp.dot(v, w_ref[k],
                                        preferred_element_type=jnp.float32)
                    k += 1
        o_ref[0] = acc

        @pl.when(d == 0)
        def _():
            sum_ref[...] = jnp.zeros_like(sum_ref)
            ssq_ref[...] = jnp.zeros_like(ssq_ref)

        sum_ref[0] += jnp.sum(acc, axis=0, keepdims=True)
        ssq_ref[0] += jnp.sum(acc * acc, axis=0, keepdims=True)

    return kernel


def _bn_relu_concat_kernel(o1_ref, o2_ref, sc2_ref, sh2_ref, sc3_ref, sh3_ref,
                           out_ref):
    """out[0] = relu(o1*sc2+sh2) ; out[1] = relu(o2*sc3+sh3) (fused concat)."""
    out_ref[0] = jnp.maximum(o1_ref[...] * sc2_ref[...] + sh2_ref[...], 0.0)
    out_ref[1] = jnp.maximum(o2_ref[...] * sc3_ref[...] + sh3_ref[...], 0.0)


# ----------------------------------------------------------------------------
# pallas_call wrappers
# ----------------------------------------------------------------------------
def _compiler_params(sem):
    return pltpu.CompilerParams(dimension_semantics=sem,
                                vmem_limit_bytes=VMEM_LIMIT)


def _conv1x1_stats(x2, wblk, b_t, tr, G):
    R, Ki = x2.shape
    _, Co = wblk.shape
    nbg = (R // tr) // G
    return pl.pallas_call(
        _conv1x1_stats_kernel,
        out_shape=(jax.ShapeDtypeStruct((R, Co), jnp.float32),
                   jax.ShapeDtypeStruct((G, 1, Co), jnp.float32),
                   jax.ShapeDtypeStruct((G, 1, Co), jnp.float32)),
        grid=(G, nbg),
        in_specs=[pl.BlockSpec((tr, Ki), lambda g, i: (g * nbg + i, 0)),
                  pl.BlockSpec((Ki, Co), lambda g, i: (0, 0)),
                  pl.BlockSpec((1, Co), lambda g, i: (0, 0))],
        out_specs=(pl.BlockSpec((tr, Co), lambda g, i: (g * nbg + i, 0)),
                   pl.BlockSpec((1, 1, Co), lambda g, i: (g, 0, 0)),
                   pl.BlockSpec((1, 1, Co), lambda g, i: (g, 0, 0))),
        compiler_params=_compiler_params(("parallel", "arbitrary")),
    )(x2, wblk, b_t)


def _bn_relu_conv1x1_stats(s, sc, sh, wblk, b_t, tr, G):
    R, Ki = s.shape
    _, Co = wblk.shape
    nbg = (R // tr) // G
    return pl.pallas_call(
        _bn_relu_conv1x1_stats_kernel,
        out_shape=(jax.ShapeDtypeStruct((R, Ki), jnp.float32),
                   jax.ShapeDtypeStruct((R, Co), jnp.float32),
                   jax.ShapeDtypeStruct((G, 1, Co), jnp.float32),
                   jax.ShapeDtypeStruct((G, 1, Co), jnp.float32)),
        grid=(G, nbg),
        in_specs=[pl.BlockSpec((tr, Ki), lambda g, i: (g * nbg + i, 0)),
                  pl.BlockSpec((1, Ki), lambda g, i: (0, 0)),
                  pl.BlockSpec((1, Ki), lambda g, i: (0, 0)),
                  pl.BlockSpec((Ki, Co), lambda g, i: (0, 0)),
                  pl.BlockSpec((1, Co), lambda g, i: (0, 0))],
        out_specs=(pl.BlockSpec((tr, Ki), lambda g, i: (g * nbg + i, 0)),
                   pl.BlockSpec((tr, Co), lambda g, i: (g * nbg + i, 0)),
                   pl.BlockSpec((1, 1, Co), lambda g, i: (g, 0, 0)),
                   pl.BlockSpec((1, 1, Co), lambda g, i: (g, 0, 0))),
        compiler_params=_compiler_params(("parallel", "arbitrary")),
    )(s, sc, sh, wblk, b_t)


def _conv3x3_stats(a_pad, w3b, b_t, N, D, H, W, Csq, Cexp):
    WpCsq = (W + 2) * Csq
    WCsq = W * Csq
    WCexp = W * Cexp
    kern = _make_conv3_kernel(H, W, Csq, Cexp)
    return pl.pallas_call(
        kern,
        out_shape=(jax.ShapeDtypeStruct((N * D, H, WCexp), jnp.float32),
                   jax.ShapeDtypeStruct((N, 1, WCexp), jnp.float32),
                   jax.ShapeDtypeStruct((N, 1, WCexp), jnp.float32)),
        grid=(N, D),
        in_specs=[pl.BlockSpec((1, 1, H + 2, WpCsq), lambda n, d: (n, d, 0, 0)),
                  pl.BlockSpec((1, 1, H + 2, WpCsq), lambda n, d: (n, d + 1, 0, 0)),
                  pl.BlockSpec((1, 1, H + 2, WpCsq), lambda n, d: (n, d + 2, 0, 0)),
                  pl.BlockSpec((27, WCsq, WCexp), lambda n, d: (0, 0, 0)),
                  pl.BlockSpec((1, WCexp), lambda n, d: (0, 0))],
        out_specs=(pl.BlockSpec((1, H, WCexp), lambda n, d: (n * D + d, 0, 0)),
                   pl.BlockSpec((1, 1, WCexp), lambda n, d: (n, 0, 0)),
                   pl.BlockSpec((1, 1, WCexp), lambda n, d: (n, 0, 0))),
        compiler_params=_compiler_params(("parallel", "arbitrary")),
    )(a_pad, a_pad, a_pad, w3b, b_t)


def _bn_relu_concat(o1, o2, sc2, sh2, sc3, sh3, tr):
    R, C = o1.shape
    nb = R // tr
    return pl.pallas_call(
        _bn_relu_concat_kernel,
        out_shape=jax.ShapeDtypeStruct((2, R, C), jnp.float32),
        grid=(nb,),
        in_specs=[pl.BlockSpec((tr, C), lambda i: (i, 0)),
                  pl.BlockSpec((tr, C), lambda i: (i, 0)),
                  pl.BlockSpec((1, C), lambda i: (0, 0)),
                  pl.BlockSpec((1, C), lambda i: (0, 0)),
                  pl.BlockSpec((1, C), lambda i: (0, 0)),
                  pl.BlockSpec((1, C), lambda i: (0, 0))],
        out_specs=pl.BlockSpec((2, tr, C), lambda i: (0, i, 0)),
        compiler_params=_compiler_params(("parallel",)),
    )(o1, o2, sc2, sh2, sc3, sh3)


# ----------------------------------------------------------------------------
# fire forward
# ----------------------------------------------------------------------------
def fire_forward(x, p, max_row_tile=1024):
    """x: (N, Cin, D, H, W) float32 (PyTorch NCDHW).  Returns NCDHW output."""
    N, Cin, D, H, W = x.shape
    P = N * D * H * W                 # voxel count per channel
    R = N * D * H                     # kernel rows (W fused into lanes)
    Csq = p['w1'].shape[0]
    Cexp = p['w2'].shape[0]
    WCin, WCsq, WCexp = W * Cin, W * Csq, W * Cexp

    tr = _pick_row_tile(R, max_row_tile)
    assert R % tr == 0
    nb = R // tr
    G = 2 if (nb >= 2 and nb % 2 == 0) else 1   # per-core BN partials (v7x megacore)

    # ---- edge glue: NCDHW -> (N*D*H, W*Cin), channels-last + W fused ----------
    # TODO(synk): accept/return channels-last from the caller to drop these
    # two full-tensor XLA transposes.
    x2 = jnp.transpose(x, (0, 2, 3, 4, 1)).reshape(R, WCin)

    # W-block-diagonal weights -> every conv is a lane-dense 2-D GEMM
    w1b = _block_diag(p['w1'].reshape(Csq, Cin).T, W)        # (W*Cin,  W*Csq)
    w2b = _block_diag(p['w2'].reshape(Cexp, Csq).T, W)       # (W*Csq,  W*Cexp)
    w3m = jnp.transpose(p['w3'], (2, 3, 4, 1, 0)).reshape(27, Csq, Cexp)
    eye = jnp.eye(W, dtype=w3m.dtype)
    w3b = (eye[None, :, None, :, None] * w3m[:, None, :, None, :]
           ).reshape(27, WCsq, WCexp)                        # 27 block-diag taps

    b1t = _tile_w(p['b1'], W)
    b2t = _tile_w(p['b2'], W)
    b3t = _tile_w(p['b3'], W)

    # ---- conv1 (1x1x1 squeeze) + BN1 batch statistics --------------------------
    s, s_sum, s_ssq = _conv1x1_stats(x2, w1b, b1t, tr, G)
    sum1 = s_sum.sum(axis=(0, 1)).reshape(W, Csq).sum(0)
    ssq1 = s_ssq.sum(axis=(0, 1)).reshape(W, Csq).sum(0)
    sc1, sh1 = _bn_fold(sum1, ssq1, P, p['g1'], p['be1'])

    # ---- BN1 + ReLU + conv2 (1x1x1 expand) + BN2 statistics --------------------
    a, o1, o1_sum, o1_ssq = _bn_relu_conv1x1_stats(
        s, _tile_w(sc1, W), _tile_w(sh1, W), w2b, b2t, tr, G)
    sum2 = o1_sum.sum(axis=(0, 1)).reshape(W, Cexp).sum(0)
    ssq2 = o1_ssq.sum(axis=(0, 1)).reshape(W, Cexp).sum(0)
    sc2, sh2 = _bn_fold(sum2, ssq2, P, p['g2'], p['be2'])

    # ---- conv3 (3x3x3 expand, pad=1): im2col fused in-kernel + BN3 statistics --
    # only the zero-padding of the (small) squeeze activation stays in XLA
    a_pad = jnp.pad(a.reshape(N, D, H, W, Csq),
                    ((0, 0), (1, 1), (1, 1), (1, 1), (0, 0)))
    a_pad = a_pad.reshape(N, D + 2, H + 2, (W + 2) * Csq)
    o2_3d, o2_sum, o2_ssq = _conv3x3_stats(a_pad, w3b, b3t, N, D, H, W, Csq, Cexp)
    o2 = o2_3d.reshape(R, WCexp)
    sum3 = o2_sum.sum(axis=(0, 1)).reshape(W, Cexp).sum(0)
    ssq3 = o2_ssq.sum(axis=(0, 1)).reshape(W, Cexp).sum(0)
    sc3, sh3 = _bn_fold(sum3, ssq3, P, p['g3'], p['be3'])

    # ---- BN2/BN3 affine + channel concat + final ReLU (single fused kernel) ----
    out2 = _bn_relu_concat(o1, o2,
                           _tile_w(sc2, W), _tile_w(sh2, W),
                           _tile_w(sc3, W), _tile_w(sh3, W), tr)

    # ---- edge glue: (2, N*D*H, W*Cexp) -> NCDHW, channel order [conv2, conv3] --
    out = out2.reshape(2, N, D, H, W, Cexp)
    out = jnp.transpose(out, (1, 0, 5, 2, 3, 4)).reshape(N, 2 * Cexp, D, H, W)
    return out


# ----------------------------------------------------------------------------
# Pure-JAX reference (for validation)
# ----------------------------------------------------------------------------
def fire_reference(x, p):
    def conv(t, w, b, pad):
        out = lax.conv_general_dilated(
            t, w, window_strides=(1, 1, 1), padding=[(pad, pad)] * 3,
            dimension_numbers=('NCDHW', 'OIDHW', 'NCDHW'),
            precision=lax.Precision.HIGHEST)
        return out + b[None, :, None, None, None]

    def bn(t, gamma, beta):
        mean = t.mean(axis=(0, 2, 3, 4), keepdims=True)
        var = t.var(axis=(0, 2, 3, 4), keepdims=True)   # biased, like PyTorch train
        return ((t - mean) / jnp.sqrt(var + EPS)
                * gamma[None, :, None, None, None] + beta[None, :, None, None, None])

    s = jax.nn.relu(bn(conv(x, p['w1'], p['b1'], 0), p['g1'], p['be1']))
    o1 = bn(conv(s, p['w2'], p['b2'], 0), p['g2'], p['be2'])
    o2 = bn(conv(s, p['w3'], p['b3'], 1), p['g3'], p['be3'])
    return jax.nn.relu(jnp.concatenate([o1, o2], axis=1))


# ----------------------------------------------------------------------------
if __name__ == "__main__":
    inplanes, squeeze_planes, expand_planes = 4, 4, 8
    N, D, H, W = 2, 8, 8, 8

    key = jax.random.PRNGKey(0)
    ks = jax.random.split(key, 7)

    # Deterministic synthetic init mirroring the module's __init__:
    #   conv weights ~ N(0, sqrt(2 / (k0*k1*in_channels))); BN gamma=1, beta=0.
    std1 = (2.0 / (1 * 1 * inplanes)) ** 0.5
    std2 = (2.0 / (1 * 1 * squeeze_planes)) ** 0.5
    std3 = (2.0 / (3 * 3 * squeeze_planes)) ** 0.5
    params = dict(
        w1=std1 * jax.random.normal(ks[0], (squeeze_planes, inplanes, 1, 1, 1), jnp.float32),
        b1=0.1 * jax.random.normal(ks[1], (squeeze_planes,), jnp.float32),
        w2=std2 * jax.random.normal(ks[2], (expand_planes, squeeze_planes, 1, 1, 1), jnp.float32),
        b2=0.1 * jax.random.normal(ks[3], (expand_planes,), jnp.float32),
        w3=std3 * jax.random.normal(ks[4], (expand_planes, squeeze_planes, 3, 3, 3), jnp.float32),
        b3=0.1 * jax.random.normal(ks[5], (expand_planes,), jnp.float32),
        g1=jnp.ones((squeeze_planes,), jnp.float32),
        be1=jnp.zeros((squeeze_planes,), jnp.float32),
        g2=jnp.ones((expand_planes,), jnp.float32),
        be2=jnp.zeros((expand_planes,), jnp.float32),
        g3=jnp.ones((expand_planes,), jnp.float32),
        be3=jnp.zeros((expand_planes,), jnp.float32),
    )

    x = jax.random.normal(ks[6], (N, inplanes, D, H, W), jnp.float32)

    out = fire_forward(x, params)
    out = jax.block_until_ready(out)

    ref = jax.block_until_ready(fire_reference(x, params))
    assert out.shape == (N, 2 * expand_planes, D, H, W), out.shape
    np.testing.assert_allclose(np.asarray(out), np.asarray(ref), rtol=2e-3, atol=2e-3)

    print("KERNEL_OK")
</pallas_src>

<mosaic_0001>
module attributes {stable_mosaic.version = 11 : i64} {
  func.func @_conv1x1_stats_kernel(%arg0: i32, %arg1: i32, %arg2: memref<128x32xf32, #tpu.memory_space<vmem>>, %arg3: memref<32x32xf32, #tpu.memory_space<vmem>>, %arg4: memref<1x32xf32, #tpu.memory_space<vmem>>, %arg5: memref<128x32xf32, #tpu.memory_space<vmem>>, %arg6: memref<1x1x32xf32, #tpu.memory_space<vmem>>, %arg7: memref<1x1x32xf32, #tpu.memory_space<vmem>>) attributes {dimension_semantics = [#tpu.dimension_semantics<parallel>, #tpu.dimension_semantics<arbitrary>], iteration_bounds = array<i64: 1, 1>, scalar_prefetch = 0 : i64, scratch_operands = 0 : i64, tpu.core_type = #tpu.core_type<tc>, window_params = [{transform_indices = @transform_0, window_bounds = array<i64: 128, 32>}, {pipeline_mode = #tpu.pipeline_mode<synchronous>, transform_indices = @transform_1, window_bounds = array<i64: 32, 32>}, {pipeline_mode = #tpu.pipeline_mode<synchronous>, transform_indices = @transform_2, window_bounds = array<i64: 1, 32>}, {transform_indices = @transform_3, window_bounds = array<i64: 128, 32>}, {transform_indices = @transform_4, window_bounds = array<i64: 1, 1, 32>}, {transform_indices = @transform_5, window_bounds = array<i64: 1, 1, 32>}]} {
    %c0 = arith.constant 0 : index
    %c0_0 = arith.constant 0 : index
    %0 = vector.load %arg2[%c0, %c0_0] : memref<128x32xf32, #tpu.memory_space<vmem>>, vector<128x32xf32>
    %c0_1 = arith.constant 0 : index
    %c0_2 = arith.constant 0 : index
    %1 = vector.load %arg3[%c0_1, %c0_2] : memref<32x32xf32, #tpu.memory_space<vmem>>, vector<32x32xf32>
    %cst = arith.constant dense<0.000000e+00> : vector<128x32xf32>
    %2 = tpu.matmul %0, %1, %cst {dimension_numbers = #tpu.dot_dimension_numbers<[1], [0], [0], [1], [0, 0, 1, 1], [], []>} : vector<128x32xf32>, vector<32x32xf32>, vector<128x32xf32> -> vector<128x32xf32>
    %c0_3 = arith.constant 0 : index
    %c0_4 = arith.constant 0 : index
    %3 = vector.load %arg4[%c0_3, %c0_4] : memref<1x32xf32, #tpu.memory_space<vmem>>, vector<1x32xf32>
    %4 = vector.broadcast %3 : vector<1x32xf32> to vector<128x32xf32>
    %5 = arith.addf %2, %4 : vector<128x32xf32>
    %c0_5 = arith.constant 0 : index
    %c0_6 = arith.constant 0 : index
    %6 = vector.load %arg5[%c0_5, %c0_6] : memref<128x32xf32, #tpu.memory_space<vmem>>, vector<128x32xf32>
    tpu.vector_store %arg5[%c0_5, %c0_6], %5 {strides = array<i32>} : memref<128x32xf32, #tpu.memory_space<vmem>>, vector<128x32xf32>,
    %c0_i32 = arith.constant 0 : i32
    %7 = arith.cmpi eq, %arg1, %c0_i32 : i32
    %8 = arith.extui %7 : i1 to i32
    %c0_i32_7 = arith.constant 0 : i32
    %9 = arith.cmpi ne, %8, %c0_i32_7 : i32
    scf.if %9 {
      %cst_22 = arith.constant 0.000000e+00 : f32
      %27 = vector.broadcast %cst_22 : f32 to vector<1x1x32xf32>
      %c0_23 = arith.constant 0 : index
      %c0_24 = arith.constant 0 : index
      %c0_25 = arith.constant 0 : index
      %28 = vector.load %arg6[%c0_23, %c0_24, %c0_25] : memref<1x1x32xf32, #tpu.memory_space<vmem>>, vector<1x1x32xf32>
      tpu.vector_store %arg6[%c0_23, %c0_24, %c0_25], %27 {strides = array<i32>} : memref<1x1x32xf32, #tpu.memory_space<vmem>>, vector<1x1x32xf32>,
      %cst_26 = arith.constant 0.000000e+00 : f32
      %29 = vector.broadcast %cst_26 : f32 to vector<1x1x32xf32>
      %c0_27 = arith.constant 0 : index
      %c0_28 = arith.constant 0 : index
      %c0_29 = arith.constant 0 : index
      %30 = vector.load %arg7[%c0_27, %c0_28, %c0_29] : memref<1x1x32xf32, #tpu.memory_space<vmem>>, vector<1x1x32xf32>
      tpu.vector_store %arg7[%c0_27, %c0_28, %c0_29], %29 {strides = array<i32>} : memref<1x1x32xf32, #tpu.memory_space<vmem>>, vector<1x1x32xf32>,
    } else {
    }
    %c0_8 = arith.constant 0 : index
    %c0_9 = arith.constant 0 : index
    %c0_10 = arith.constant 0 : index
    %10 = vector.load %arg6[%c0_8, %c0_9, %c0_10] : memref<1x1x32xf32, #tpu.memory_space<vmem>>, vector<1x1x32xf32>
    %11 = vector.shape_cast %10 : vector<1x1x32xf32> to vector<1x32xf32>
    %cst_11 = arith.constant dense<0.000000e+00> : vector<32xf32>
    %12 = vector.multi_reduction <add>, %5, %cst_11 [0] : vector<128x32xf32> to vector<32xf32>
    %13 = vector.shape_cast %12 : vector<32xf32> to vector<1x32xf32>
    %14 = arith.addf %11, %13 : vector<1x32xf32>
    %c0_12 = arith.constant 0 : index
    %c0_13 = arith.constant 0 : index
    %c0_14 = arith.constant 0 : index
    %15 = vector.load %arg6[%c0_12, %c0_13, %c0_14] : memref<1x1x32xf32, #tpu.memory_space<vmem>>, vector<1x1x32xf32>
    %16 = vector.shape_cast %15 : vector<1x1x32xf32> to vector<1x32xf32>
    %17 = vector.shape_cast %14 : vector<1x32xf32> to vector<1x1x32xf32>
    tpu.vector_store %arg6[%c0_12, %c0_13, %c0_14], %17 {strides = array<i32>} : memref<1x1x32xf32, #tpu.memory_space<vmem>>, vector<1x1x32xf32>,
    %c0_15 = arith.constant 0 : index
    %c0_16 = arith.constant 0 : index
    %c0_17 = arith.constant 0 : index
    %18 = vector.load %arg7[%c0_15, %c0_16, %c0_17] : memref<1x1x32xf32, #tpu.memory_space<vmem>>, vector<1x1x32xf32>
    %19 = vector.shape_cast %18 : vector<1x1x32xf32> to vector<1x32xf32>
    %20 = arith.mulf %5, %5 : vector<128x32xf32>
    %cst_18 = arith.constant dense<0.000000e+00> : vector<32xf32>
    %21 = vector.multi_reduction <add>, %20, %cst_18 [0] : vector<128x32xf32> to vector<32xf32>
    %22 = vector.shape_cast %21 : vector<32xf32> to vector<1x32xf32>
    %23 = arith.addf %19, %22 : vector<1x32xf32>
    %c0_19 = arith.constant 0 : index
    %c0_20 = arith.constant 0 : index
    %c0_21 = arith.constant 0 : index
    %24 = vector.load %arg7[%c0_19, %c0_20, %c0_21] : memref<1x1x32xf32, #tpu.memory_space<vmem>>, vector<1x1x32xf32>
    %25 = vector.shape_cast %24 : vector<1x1x32xf32> to vector<1x32xf32>
    %26 = vector.shape_cast %23 : vector<1x32xf32> to vector<1x1x32xf32>
    tpu.vector_store %arg7[%c0_19, %c0_20, %c0_21], %26 {strides = array<i32>} : memref<1x1x32xf32, #tpu.memory_space<vmem>>, vector<1x1x32xf32>,
    return
  }
  func.func @transform_0(%arg0: i32, %arg1: i32) -> (i32, i32) {
    %c1_i32 = arith.constant 1 : i32
    %0 = arith.muli %arg0, %c1_i32 : i32
    %1 = arith.addi %0, %arg1 : i32
    %c0_i32 = arith.constant 0 : i32
    %c0_i32_0 = arith.constant 0 : i32
    return %1, %c0_i32 : i32, i32
  }
  func.func @transform_1(%arg0: i32, %arg1: i32) -> (i32, i32) {
    %c0_i32 = arith.constant 0 : i32
    %c0_i32_0 = arith.constant 0 : i32
    %c0_i32_1 = arith.constant 0 : i32
    return %c0_i32, %c0_i32_0 : i32, i32
  }
  func.func @transform_2(%arg0: i32, %arg1: i32) -> (i32, i32) {
    %c0_i32 = arith.constant 0 : i32
    %c0_i32_0 = arith.constant 0 : i32
    %c0_i32_1 = arith.constant 0 : i32
    return %c0_i32, %c0_i32_0 : i32, i32
  }
  func.func @transform_3(%arg0: i32, %arg1: i32) -> (i32, i32) {
    %c1_i32 = arith.constant 1 : i32
    %0 = arith.muli %arg0, %c1_i32 : i32
    %1 = arith.addi %0, %arg1 : i32
    %c0_i32 = arith.constant 0 : i32
    %c0_i32_0 = arith.constant 0 : i32
    return %1, %c0_i32 : i32, i32
  }
  func.func @transform_4(%arg0: i32, %arg1: i32) -> (i32, i32, i32) {
    %c0_i32 = arith.constant 0 : i32
    %c0_i32_0 = arith.constant 0 : i32
    %c0_i32_1 = arith.constant 0 : i32
    return %arg0, %c0_i32, %c0_i32_0 : i32, i32, i32
  }
  func.func @transform_5(%arg0: i32, %arg1: i32) -> (i32, i32, i32) {
    %c0_i32 = arith.constant 0 : i32
    %c0_i32_0 = arith.constant 0 : i32
    %c0_i32_1 = arith.constant 0 : i32
    return %arg0, %c0_i32, %c0_i32_0 : i32, i32, i32
  }
}

</mosaic_0001>

<llo_original>
// kernel: tpu_custom_call.1
$region0: #{tpu_custom_call.1}
  #allocation0 [shape = 'u32[]', space=smem, size = 0x4, offset = 0x4, fixed_abs, tag = 'smem constant byte address 0x4 - core index']
  #allocation1 [shape = 'u32[144,128]{1,0:T(1,128)}', space=vmem, size = 0x12000, scoped, tag = 'internal scratch']
  %s0 = inlined_call_operand.vmem [shape: f32[128,32], index: 0, kind: input, shape index: {}]
  %s1 = inlined_call_operand.vmem [shape: f32[32,32], index: 1, kind: input, shape index: {}]
  %s2 = inlined_call_operand.vmem [shape: f32[1,32], index: 2, kind: input, shape index: {}]
  %s3 = inlined_call_operand.vmem [shape: f32[128,32], index: 3, kind: output, shape index: {0}]
  %s4 = inlined_call_operand.hbm [shape: f32[1,1,32], index: 4, kind: output, shape index: {1}]
  %s5 = inlined_call_operand.hbm [shape: f32[1,1,32], index: 5, kind: output, shape index: {2}]
  %6 = xla_tuple %s3, %s4, %s5
  %s7 = sld [smem:[#allocation0]]
  $region42: #{tpu_custom_call.1} parent=0
    _
  %s9 = ssub.s32 1, %s7
  %s10 = scalar_select 0, %s9, %s7
  $region1: #{tpu_custom_call.1} parent=0
    #allocation2 [shape = 'u8[512]{0}', space=vmem, size = 0x400, scoped, tag = 'output window, operand 1, single buffered']
    #allocation3 [shape = 's32[1]{0}', space=sflag, size = 0x4, scoped, tag = 'scoped memory for tpu_custom_call.1']
    #allocation4 [shape = 'u8[512]{0}', space=vmem, size = 0x400, scoped, tag = 'output window, operand 2, single buffered']
    #allocation5 [shape = 's32[1]{0}', space=sflag, size = 0x4, scoped, tag = 'scoped memory for tpu_custom_call.1']
    %11 = vsyncpa [#allocation3], 0
    %12 = vsyncpa [#allocation5], 0
    // Predicated region
    $region2: #{tpu_custom_call.1} parent=1 // pred_check
      _
    $region3: #{tpu_custom_call.1} parent=1 // pred_check_branch
      %14 = sbr.rel (0) target = $region5
    $region4: #{tpu_custom_call.1} parent=1 // pred_region
      %s15 = sadd.s32 0, 0
      %s16 = smul.u32 16, %s15
      %p17 = scmp.lt.s32.totalorder %s16, 15
      %s18 = scalar_select %p17, %s16, 15
      %s19 = smul.addr %s18, 8
      %s20 = scalar_lea.vmem %s0, %s19
      %s21 = sadd.s32 0, 0
      %s22 = smul.u32 16, %s21
    $region5: #{tpu_custom_call.1} parent=1 // pred_fallthru
      _
    // Predicated region
    $region6: #{tpu_custom_call.1} parent=1 // pred_check
      _
    $region7: #{tpu_custom_call.1} parent=1 // pred_check_branch
      %24 = sbr.rel (0) target = $region9
    $region8: #{tpu_custom_call.1} parent=1 // pred_region
      _
    $region9: #{tpu_custom_call.1} parent=1 // pred_fallthru
      _
    // Predicated region
    $region10: #{tpu_custom_call.1} parent=1 // pred_check
      _
    $region11: #{tpu_custom_call.1} parent=1 // pred_check_branch
      %26 = sbr.rel (0) target = $region13
    $region12: #{tpu_custom_call.1} parent=1 // pred_region
      _
    $region13: #{tpu_custom_call.1} parent=1 // pred_fallthru
      _
    %s27 = sadd.s32 0, 0
    %s28 = smul.u32 16, %s27
    %p29 = scmp.lt.s32.totalorder %s28, 15
    %s30 = scalar_select %p29, %s28, 15
    %s31 = smul.addr %s30, 8
    %s32 = scalar_lea.vmem %s0, %s31
    %s33 = sadd.s32 0, 0
    %s34 = smul.u32 16, %s33
    %p35 = scmp.lt.s32.totalorder %s34, 15
    %s36 = scalar_select %p35, %s34, 15
    %s37 = smul.addr %s36, 8
    %s38 = scalar_lea.vmem %s3, %s37
    %s39 = sadd.s32 0, 0
    %s40 = smul.u32 16, %s39
    %p41 = scmp.lt.s32.totalorder %s40, 15
    %s42 = scalar_select %p41, %s40, 15
    %s43 = smul.addr %s42, 8
    %s44 = scalar_lea.vmem %s0, %s43
    %s45 = sadd.s32 0, 0
    %s46 = smul.u32 16, %s45
    %s47 = sadd.s32 0, 0
    %s48 = smul.u32 16, %s47
    %p49 = scmp.lt.s32.totalorder %s48, 15
    %s50 = scalar_select %p49, %s48, 15
    %s51 = smul.addr %s50, 8
    %s52 = scalar_lea.vmem %s3, %s51
    %s53 = sadd.s32 0, 0
    %s54 = smul.u32 16, %s53
    %v55 = vld [vmem:[%s44] sm:$0xff]
    %v56 = vld [vmem:[%s44 + $0x8] sm:$0xff]
    %v57 = vld [vmem:[%s44 + $0x10] sm:$0xff]
    %v58 = vld [vmem:[%s44 + $0x18] sm:$0xff]
    %v59 = vld [vmem:[%s44 + $0x20] sm:$0xff]
    %v60 = vld [vmem:[%s44 + $0x28] sm:$0xff]
    %v61 = vld [vmem:[%s44 + $0x30] sm:$0xff]
    %v62 = vld [vmem:[%s44 + $0x38] sm:$0xff]
    %v63 = vld [vmem:[%s44 + $0x40] sm:$0xff]
    %v64 = vld [vmem:[%s44 + $0x48] sm:$0xff]
    %v65 = vld [vmem:[%s44 + $0x50] sm:$0xff]
    %v66 = vld [vmem:[%s44 + $0x58] sm:$0xff]
    %v67 = vld [vmem:[%s44 + $0x60] sm:$0xff]
    %v68 = vld [vmem:[%s44 + $0x68] sm:$0xff]
    %v69 = vld [vmem:[%s44 + $0x70] sm:$0xff]
    %v70 = vld [vmem:[%s44 + $0x78] sm:$0xff]
    %v71 = vld [vmem:[%s1] sm:$0xff]
    %v72 = vld [vmem:[%s1 + $0x8] sm:$0xff]
    %v73 = vld [vmem:[%s1 + $0x10] sm:$0xff]
    %v74 = vld [vmem:[%s1 + $0x18] sm:$0xff]
    %v75 = vld [vmem:[%s2] sm:$0x1]
    %v77 = vlaneseq
    %v78 = vshrl.u32 %v77, 7
    %v79 = vsub.s32 0, %v78
    %v80 = vrot.slane %v75, %v79
    %vm82 = vcmask 261120
    %v84 = vsel %vm82, %v55, 0
    %v87 = vsel %vm82, %v56, 0
    %v90 = vsel %vm82, %v57, 0
    %v93 = vsel %vm82, %v58, 0
    %v96 = vsel %vm82, %v59, 0
    %v99 = vsel %vm82, %v60, 0
    %v102 = vsel %vm82, %v61, 0
    %v105 = vsel %vm82, %v62, 0
    %v108 = vsel %vm82, %v63, 0
    %v111 = vsel %vm82, %v64, 0
    %v114 = vsel %vm82, %v65, 0
    %v117 = vsel %vm82, %v66, 0
    %v120 = vsel %vm82, %v67, 0
    %v123 = vsel %vm82, %v68, 0
    %v126 = vsel %vm82, %v69, 0
    %v129 = vsel %vm82, %v70, 0
    %131 = vmatprep.subr.mxu0 0.0
    %132 = vmatpush1.msra.mxu0 0.0
    %133 = vmatprep.subr.mxu0 0.0
    %134 = vmatpush1.msra.mxu0 0.0
    %135 = vmatprep.subr.mxu0 0.0
    %136 = vmatpush1.msra.mxu0 0.0
    %137 = vmatprep.subr.mxu0 0.0
    %138 = vmatpush1.msra.mxu0 0.0
    %139 = vmatprep.subr.mxu0 0.0
    %140 = vmatpush1.msra.mxu0 0.0
    %141 = vmatprep.subr.mxu0 0.0
    %142 = vmatpush1.msra.mxu0 0.0
    %143 = vmatprep.subr.mxu0 0.0
    %144 = vmatpush1.msra.mxu0 0.0
    %145 = vmatprep.subr.mxu0 0.0
    %146 = vmatpush1.msra.mxu0 0.0
    %147 = vmatprep.subr.mxu0 0.0
    %148 = vmatpush1.msra.mxu0 0.0
    %149 = vmatprep.subr.mxu0 0.0
    %150 = vmatpush1.msra.mxu0 0.0
    %151 = vmatprep.subr.mxu0 0.0
    %152 = vmatpush1.msra.mxu0 0.0
    %153 = vmatprep.subr.mxu0 0.0
    %154 = vmatpush1.msra.mxu0 0.0
    %155 = vmatprep.subr.mxu0 0.0
    %156 = vmatpush1.msra.mxu0 %v74
    %157 = vmatprep.subr.mxu0 0.0
    %158 = vmatpush1.msra.mxu0 %v73
    %159 = vmatprep.subr.mxu0 0.0
    %160 = vmatpush1.msra.mxu0 %v72
    %161 = vmatprep.subr.mxu0 0.0
    %162 = vmatpush1.msra.mxu0 %v71
    %163 = vmatprep.subr.mxu0 0.0
    %164 = vmatpush2.msra.mxu0 0.0
    %165 = vmatprep.subr.mxu0 0.0
    %166 = vmatpush2.msra.mxu0 0.0
    %167 = vmatprep.subr.mxu0 0.0
    %168 = vmatpush2.msra.mxu0 0.0
    %169 = vmatprep.subr.mxu0 0.0
    %170 = vmatpush2.msra.mxu0 0.0
    %171 = vmatprep.subr.mxu0 0.0
    %172 = vmatpush2.msra.mxu0 0.0
    %173 = vmatprep.subr.mxu0 0.0
    %174 = vmatpush2.msra.mxu0 0.0
    %175 = vmatprep.subr.mxu0 0.0
    %176 = vmatpush2.msra.mxu0 0.0
    %177 = vmatprep.subr.mxu0 0.0
    %178 = vmatpush2.msra.mxu0 0.0
    %179 = vmatprep.subr.mxu0 0.0
    %180 = vmatpush2.msra.mxu0 0.0
    %181 = vmatprep.subr.mxu0 0.0
    %182 = vmatpush2.msra.mxu0 0.0
    %183 = vmatprep.subr.mxu0 0.0
    %184 = vmatpush2.msra.mxu0 0.0
    %185 = vmatprep.subr.mxu0 0.0
    %186 = vmatpush2.msra.mxu0 0.0
    %187 = vmatprep.subr.mxu0 0.0
    %188 = vmatpush2.msra.mxu0 0.0
    %189 = vmatprep.subr.mxu0 0.0
    %190 = vmatpush2.msra.mxu0 0.0
    %191 = vmatprep.subr.mxu0 0.0
    %192 = vmatpush2.msra.mxu0 0.0
    %193 = vmatprep.subr.mxu0 0.0
    %194 = vmatpush2.msra.mxu0 0.0
    %195 = vmatprep.mubr.f32.mxu0 0.0
    %196 = vmatmul.mubr.f32.gmra.mxu0 %v84
    %v197 = vpop.f32.mrf.mxu0
    %v198 = vadd.f32 %v80, %v197
    %v199 = vpop.f32.mrf.mxu0
    %200 = vmatprep.mubr.f32.mxu0 0.0
    %201 = vmatmul.mubr.f32.gmra.mxu0 %v87
    %v202 = vpop.f32.mrf.mxu0
    %v203 = vadd.f32 %v80, %v202
    %v204 = vpop.f32.mrf.mxu0
    %205 = vmatprep.mubr.f32.mxu0 0.0
    %206 = vmatmul.mubr.f32.gmra.mxu0 %v90
    %v207 = vpop.f32.mrf.mxu0
    %v208 = vadd.f32 %v80, %v207
    %v209 = vpop.f32.mrf.mxu0
    %210 = vmatprep.mubr.f32.mxu0 0.0
    %211 = vmatmul.mubr.f32.gmra.mxu0 %v93
    %v212 = vpop.f32.mrf.mxu0
    %v213 = vadd.f32 %v80, %v212
    %v214 = vpop.f32.mrf.mxu0
    %215 = vmatprep.mubr.f32.mxu0 0.0
    %216 = vmatmul.mubr.f32.gmra.mxu0 %v96
    %v217 = vpop.f32.mrf.mxu0
    %v218 = vadd.f32 %v80, %v217
    %v219 = vpop.f32.mrf.mxu0
    %220 = vmatprep.mubr.f32.mxu0 0.0
    %221 = vmatmul.mubr.f32.gmra.mxu0 %v99
    %v222 = vpop.f32.mrf.mxu0
    %v223 = vadd.f32 %v80, %v222
    %v224 = vpop.f32.mrf.mxu0
    %225 = vmatprep.mubr.f32.mxu0 0.0
    %226 = vmatmul.mubr.f32.gmra.mxu0 %v102
    %v227 = vpop.f32.mrf.mxu0
    %v228 = vadd.f32 %v80, %v227
    %v229 = vpop.f32.mrf.mxu0
    %230 = vmatprep.mubr.f32.mxu0 0.0
    %231 = vmatmul.mubr.f32.gmra.mxu0 %v105
    %v232 = vpop.f32.mrf.mxu0
    %v233 = vadd.f32 %v80, %v232
    %v234 = vpop.f32.mrf.mxu0
    %235 = vmatprep.mubr.f32.mxu0 0.0
    %236 = vmatmul.mubr.f32.gmra.mxu0 %v108
    %v237 = vpop.f32.mrf.mxu0
    %v238 = vadd.f32 %v80, %v237
    %v239 = vpop.f32.mrf.mxu0
    %240 = vmatprep.mubr.f32.mxu0 0.0
    %241 = vmatmul.mubr.f32.gmra.mxu0 %v111
    %v242 = vpop.f32.mrf.mxu0
    %v243 = vadd.f32 %v80, %v242
    %v244 = vpop.f32.mrf.mxu0
    %245 = vmatprep.mubr.f32.mxu0 0.0
    %246 = vmatmul.mubr.f32.gmra.mxu0 %v114
    %v247 = vpop.f32.mrf.mxu0
    %v248 = vadd.f32 %v80, %v247
    %v249 = vpop.f32.mrf.mxu0
    %250 = vmatprep.mubr.f32.mxu0 0.0
    %251 = vmatmul.mubr.f32.gmra.mxu0 %v117
    %v252 = vpop.f32.mrf.mxu0
    %v253 = vadd.f32 %v80, %v252
    %v254 = vpop.f32.mrf.mxu0
    %255 = vmatprep.mubr.f32.mxu0 0.0
    %256 = vmatmul.mubr.f32.gmra.mxu0 %v120
    %v257 = vpop.f32.mrf.mxu0
    %v258 = vadd.f32 %v80, %v257
    %v259 = vpop.f32.mrf.mxu0
    %260 = vmatprep.mubr.f32.mxu0 0.0
    %261 = vmatmul.mubr.f32.gmra.mxu0 %v123
    %v262 = vpop.f32.mrf.mxu0
    %v263 = vadd.f32 %v80, %v262
    %v264 = vpop.f32.mrf.mxu0
    %265 = vmatprep.mubr.f32.mxu0 0.0
    %266 = vmatmul.mubr.f32.gmra.mxu0 %v126
    %v267 = vpop.f32.mrf.mxu0
    %v268 = vadd.f32 %v80, %v267
    %v269 = vpop.f32.mrf.mxu0
    %270 = vmatprep.mubr.f32.mxu0 0.0
    %271 = vmatmul.mubr.f32.gmra.mxu0 %v129
    %v272 = vpop.f32.mrf.mxu0
    %v273 = vadd.f32 %v80, %v272
    %v274 = vpop.f32.mrf.mxu0
    %275 = vdwg.mxu0
    %276 = vst.msk [vmem:[%s52] sm:$0xff] %vm82, %v198
    %277 = vst.msk [vmem:[%s52 + $0x8] sm:$0xff] %vm82, %v203
    %278 = vst.msk [vmem:[%s52 + $0x10] sm:$0xff] %vm82, %v208
    %279 = vst.msk [vmem:[%s52 + $0x18] sm:$0xff] %vm82, %v213
    %280 = vst.msk [vmem:[%s52 + $0x20] sm:$0xff] %vm82, %v218
    %281 = vst.msk [vmem:[%s52 + $0x28] sm:$0xff] %vm82, %v223
    %282 = vst.msk [vmem:[%s52 + $0x30] sm:$0xff] %vm82, %v228
    %283 = vst.msk [vmem:[%s52 + $0x38] sm:$0xff] %vm82, %v233
    %284 = vst.msk [vmem:[%s52 + $0x40] sm:$0xff] %vm82, %v238
    %285 = vst.msk [vmem:[%s52 + $0x48] sm:$0xff] %vm82, %v243
    %286 = vst.msk [vmem:[%s52 + $0x50] sm:$0xff] %vm82, %v248
    %287 = vst.msk [vmem:[%s52 + $0x58] sm:$0xff] %vm82, %v253
    %288 = vst.msk [vmem:[%s52 + $0x60] sm:$0xff] %vm82, %v258
    %289 = vst.msk [vmem:[%s52 + $0x68] sm:$0xff] %vm82, %v263
    %290 = vst.msk [vmem:[%s52 + $0x70] sm:$0xff] %vm82, %v268
    %291 = vst.msk [vmem:[%s52 + $0x78] sm:$0xff] %vm82, %v273
    %p292 = scmp.eq.s32.totalorder 0, 0
    // Predicated region
    $region14: #{tpu_custom_call.1} parent=1 // pred_check
      %p293 = pneg %p292
    $region15: #{tpu_custom_call.1} parent=1 // pred_check_branch
      %295 = sbr.rel (%p293) target = $region17
    $region16: #{tpu_custom_call.1} parent=1 // pred_region
      %vm296 = vcmask 253952
      %297 = vst.msk [vmem:[#allocation2] sm:$0x1] %vm296, 0.0
      %298 = vst.msk [vmem:[#allocation4] sm:$0x1] %vm296, 0.0
    $region17: #{tpu_custom_call.1} parent=1 // pred_fallthru
      _
    %v299 = vld [vmem:[#allocation2] sm:$0x1]
    %v300 = vsel %vm82, %v198, 0.0
    %v301 = vsel %vm82, %v203, 0.0
    %v302 = vadd.f32 %v300, %v301
    %v303 = vsel %vm82, %v208, 0.0
    %v304 = vadd.f32 %v302, %v303
    %v305 = vsel %vm82, %v213, 0.0
    %v306 = vadd.f32 %v304, %v305
    %v307 = vsel %vm82, %v218, 0.0
    %v308 = vadd.f32 %v306, %v307
    %v309 = vsel %vm82, %v223, 0.0
    %v310 = vadd.f32 %v308, %v309
    %v311 = vsel %vm82, %v228, 0.0
    %v312 = vadd.f32 %v310, %v311
    %v313 = vsel %vm82, %v233, 0.0
    %v314 = vadd.f32 %v312, %v313
    %v315 = vsel %vm82, %v238, 0.0
    %v316 = vadd.f32 %v314, %v315
    %v317 = vsel %vm82, %v243, 0.0
    %v318 = vadd.f32 %v316, %v317
    %v319 = vsel %vm82, %v248, 0.0
    %v320 = vadd.f32 %v318, %v319
    %v321 = vsel %vm82, %v253, 0.0
    %v322 = vadd.f32 %v320, %v321
    %v323 = vsel %vm82, %v258, 0.0
    %v324 = vadd.f32 %v322, %v323
    %v325 = vsel %vm82, %v263, 0.0
    %v326 = vadd.f32 %v324, %v325
    %v327 = vsel %vm82, %v268, 0.0
    %v328 = vadd.f32 %v326, %v327
    %v329 = vsel %vm82, %v273, 0.0
    %v330 = vadd.f32 %v328, %v329
    %v331 = vrot.slane %v330, 4
    %v332 = vadd.f32 %v330, %v331
    %v333 = vrot.slane %v332, 2
    %v334 = vadd.f32 %v332, %v333
    %v335 = vrot.slane %v334, 1
    %v336 = vadd.f32 %v334, %v335
    %v337 = vadd.f32 %v299, %v336
    %vm338 = vcmask 253952
    %339 = vst.msk [vmem:[#allocation2] sm:$0x1] %vm338, %v337
    %v340 = vld [vmem:[#allocation4] sm:$0x1]
    %v341 = vmul.f32 %v198, %v198
    %v342 = vmul.f32 %v203, %v203
    %v343 = vmul.f32 %v208, %v208
    %v344 = vmul.f32 %v213, %v213
    %v345 = vmul.f32 %v218, %v218
    %v346 = vmul.f32 %v223, %v223
    %v347 = vmul.f32 %v228, %v228
    %v348 = vmul.f32 %v233, %v233
    %v349 = vmul.f32 %v238, %v238
    %v350 = vmul.f32 %v243, %v243
    %v351 = vmul.f32 %v248, %v248
    %v352 = vmul.f32 %v253, %v253
    %v353 = vmul.f32 %v258, %v258
    %v354 = vmul.f32 %v263, %v263
    %v355 = vmul.f32 %v268, %v268
    %v356 = vmul.f32 %v273, %v273
    %v357 = vsel %vm82, %v341, 0.0
    %v358 = vsel %vm82, %v342, 0.0
    %v359 = vadd.f32 %v357, %v358
    %v360 = vsel %vm82, %v343, 0.0
    %v361 = vadd.f32 %v359, %v360
    %v362 = vsel %vm82, %v344, 0.0
    %v363 = vadd.f32 %v361, %v362
    %v364 = vsel %vm82, %v345, 0.0
    %v365 = vadd.f32 %v363, %v364
    %v366 = vsel %vm82, %v346, 0.0
    %v367 = vadd.f32 %v365, %v366
    %v368 = vsel %vm82, %v347, 0.0
    %v369 = vadd.f32 %v367, %v368
    %v370 = vsel %vm82, %v348, 0.0
    %v371 = vadd.f32 %v369, %v370
    %v372 = vsel %vm82, %v349, 0.0
    %v373 = vadd.f32 %v371, %v372
    %v374 = vsel %vm82, %v350, 0.0
    %v375 = vadd.f32 %v373, %v374
    %v376 = vsel %vm82, %v351, 0.0
    %v377 = vadd.f32 %v375, %v376
    %v378 = vsel %vm82, %v352, 0.0
    %v379 = vadd.f32 %v377, %v378
    %v380 = vsel %vm82, %v353, 0.0
    %v381 = vadd.f32 %v379, %v380
    %v382 = vsel %vm82, %v354, 0.0
    %v383 = vadd.f32 %v381, %v382
    %v384 = vsel %vm82, %v355, 0.0
    %v385 = vadd.f32 %v383, %v384
    %v386 = vsel %vm82, %v356, 0.0
    %v387 = vadd.f32 %v385, %v386
    %v388 = vrot.slane %v387, 4
    %v389 = vadd.f32 %v387, %v388
    %v390 = vrot.slane %v389, 2
    %v391 = vadd.f32 %v389, %v390
    %v392 = vrot.slane %v391, 1
    %v393 = vadd.f32 %v391, %v392
    %v394 = vadd.f32 %v340, %v393
    %395 = vst.msk [vmem:[#allocation4] sm:$0x1] %vm338, %v394
    %s396 = sadd.s32 0, 0
    %s397 = smul.u32 16, %s396
    %p398 = scmp.lt.s32.totalorder %s397, 15
    %s399 = scalar_select %p398, %s397, 15
    %s400 = smul.addr %s399, 8
    %s401 = scalar_lea.vmem %s3, %s400
    // Predicated region
    $region18: #{tpu_custom_call.1} parent=1 // pred_check
      _
    $region19: #{tpu_custom_call.1} parent=1 // pred_check_branch
      %403 = sbr.rel (0) target = $region21
    $region20: #{tpu_custom_call.1} parent=1 // pred_region
      %s404 = sadd.s32 0, 0
      %s405 = smul.u32 16, %s404
    $region21: #{tpu_custom_call.1} parent=1 // pred_fallthru
      _
    // Predicated region
    $region22: #{tpu_custom_call.1} parent=1 // pred_check
      _
    $region23: #{tpu_custom_call.1} parent=1 // pred_check_branch
      %407 = sbr.rel (0) target = $region25
    $region24: #{tpu_custom_call.1} parent=1 // pred_region
      %s409 = ssub.s32 16, 16
      %410 = vsyncadd [#allocation3], %s409
      %s412 = sshll.u32 [#allocation2], 4
      %s413 = int_to_ptr.vmem [resolvable:$true] %s412
      %415 = dma.vmem_to_hbm [thread:$0]  %s413, 16, %s4, [#allocation3]
    $region25: #{tpu_custom_call.1} parent=1 // pred_fallthru
      _
    // Predicated region
    $region26: #{tpu_custom_call.1} parent=1 // pred_check
      _
    $region27: #{tpu_custom_call.1} parent=1 // pred_check_branch
      %417 = sbr.rel (0) target = $region29
    $region28: #{tpu_custom_call.1} parent=1 // pred_region
      %s419 = ssub.s32 16, 16
      %420 = vsyncadd [#allocation5], %s419
      %s422 = sshll.u32 [#allocation4], 4
      %s423 = int_to_ptr.vmem [resolvable:$true] %s422
      %425 = dma.vmem_to_hbm [thread:$0]  %s423, 16, %s5, [#allocation5]
    $region29: #{tpu_custom_call.1} parent=1 // pred_fallthru
      _
    // Predicated region
    $region30: #{tpu_custom_call.1} parent=1 // pred_check
      _
    $region31: #{tpu_custom_call.1} parent=1 // pred_check_branch
      %427 = sbr.rel (0) target = $region33
    $region32: #{tpu_custom_call.1} parent=1 // pred_region
      %s428 = sadd.s32 0, 0
      %s429 = smul.u32 16, %s428
      %p430 = scmp.lt.s32.totalorder %s429, 15
      %s431 = scalar_select %p430, %s429, 15
      %s432 = smul.addr %s431, 8
      %s433 = scalar_lea.vmem %s3, %s432
    $region33: #{tpu_custom_call.1} parent=1 // pred_fallthru
      _
    // Predicated region
    $region34: #{tpu_custom_call.1} parent=1 // pred_check
      _
    $region35: #{tpu_custom_call.1} parent=1 // pred_check_branch
      %435 = sbr.rel (0) target = $region37
    $region36: #{tpu_custom_call.1} parent=1 // pred_region
      %436 = dma.done [#allocation3], 16
    $region37: #{tpu_custom_call.1} parent=1 // pred_fallthru
      _
    // Predicated region
    $region38: #{tpu_custom_call.1} parent=1 // pred_check
      _
    $region39: #{tpu_custom_call.1} parent=1 // pred_check_branch
      %438 = sbr.rel (0) target = $region41
    $region40: #{tpu_custom_call.1} parent=1 // pred_region
      %439 = dma.done [#allocation5], 16
    $region41: #{tpu_custom_call.1} parent=1 // pred_fallthru
      _
    %440 = vsyncpa [#allocation3], 1
    %441 = vsyncpa [#allocation5], 1

</llo_original>
